<compile_context>
chip_gen: v7x
topology: tpu7x:2x2x1
jax: 0.10.0
libtpu: 0.0.40
codegen_flags: <defaults>
</compile_context>

<pallas_src>
import jax
import jax.numpy as jnp
from jax.experimental import pallas as pl
from jax.experimental.pallas import tpu as pltpu


# ---------------------------------------------------------------------------
# Kernel body: two MXU matmuls + f32 bias/ReLU on the current batch tile.
# ---------------------------------------------------------------------------
def mlp_kernel(x_ref, w1_ref, b1_ref, w2_ref, b2_ref, o_ref):
    x = x_ref[...].astype(w1_ref.dtype)                               # VPU cast (free, mem-bound)
    h = jnp.dot(x, w1_ref[...], preferred_element_type=jnp.float32)   # MXU, f32 acc
    h = jnp.maximum(h + b1_ref[...], 0.0)                             # f32 bias + ReLU
    h = h.astype(w2_ref.dtype)                                        # compute dtype for MXU
    out = jnp.dot(h, w2_ref[...], preferred_element_type=jnp.float32)
    o_ref[...] = (out + b2_ref[...]).astype(o_ref.dtype)


# ---------------------------------------------------------------------------
# Helpers
# ---------------------------------------------------------------------------
def _round_up(n, m):
    return ((n + m - 1) // m) * m


def _pick_pack(E):
    """Return (pack, Ep): packed output lane width pack*Ep == 128 (or pack=1
    with Ep a multiple of 128 for wide embeddings). Ep >= E, zero-padded."""
    if E > 128:
        return 1, _round_up(E, 128)
    Ep = 1
    while Ep < E:
        Ep *= 2
    return 128 // Ep, Ep


def _block_diag(w, n):
    """(in, out) -> (n*in, n*out) with `w` repeated along diagonal blocks."""
    i, o = w.shape
    eye = jnp.eye(n, dtype=w.dtype)
    return (eye[:, None, :, None] * w[None, :, None, :]).reshape(n * i, n * o)


def _vmem_capacity_bytes():
    """Physical VMEM of the attached TPU; conservative (v7x, 64 MiB) fallback."""
    try:
        info = pltpu.get_tpu_info()
        cap = getattr(info, "vmem_capacity_bytes", None)
        if cap:
            return int(cap)
    except Exception:
        pass
    return 64 << 20


# ---------------------------------------------------------------------------
# Forward factory: packs weights once, returns a jitted forward(x).
# ---------------------------------------------------------------------------
def make_contrastive_forward(w1, b1, w2, b2, *,
                             compute_dtype=jnp.bfloat16,
                             out_dtype=jnp.float32,
                             max_block_rows=None):
    """w1: (D, H=32), b1: (H,), w2: (H, E), b2: (E,).  Returns fwd(x)->(B, E).

    compute_dtype=jnp.float32 gives bit-closer f32 semantics (still fine on
    memory-bound v6e/v7x); the default bf16 matches the previous validated
    path (f32 accumulation, bias/ReLU in f32)."""
    D, H = w1.shape
    E = w2.shape[1]
    pack, Ep = _pick_pack(E)

    # --- one-time weight packing (hoisted out of the per-call path) ---------
    b1f = jnp.reshape(b1, (1, H)).astype(jnp.float32)
    b2f = jnp.reshape(b2, (1, E)).astype(jnp.float32)
    w2e, b2e = w2, b2f
    if Ep != E:
        w2e = jnp.pad(w2, ((0, 0), (0, Ep - E)))
        b2e = jnp.pad(b2f, ((0, 0), (0, Ep - E)))
    w1p = _block_diag(w1.astype(compute_dtype), pack)    # (pack*D, pack*H)
    w2p = _block_diag(w2e.astype(compute_dtype), pack)   # (pack*H, pack*Ep)
    b1p = jnp.tile(b1f, (1, pack))                       # (1, pack*H) f32
    b2p = jnp.tile(b2e, (1, pack))                       # (1, pack*Ep) f32
    w1p, b1p, w2p, b2p = map(jax.block_until_ready, (w1p, b1p, w2p, b2p))

    # --- tile sizing from the actual per-step VMEM footprint ----------------
    vmem = _vmem_capacity_bytes()
    cdt = jnp.dtype(compute_dtype).itemsize
    odt = jnp.dtype(out_dtype).itemsize
    per_row = (2 * pack * D * 4          # x block (f32 in), double-buffered
               + pack * D * cdt          # in-kernel compute-dtype cast of x
               + 2 * pack * Ep * odt     # output block, double-buffered
               + pack * H * 4            # f32 hidden activations
               + pack * H * cdt)         # compute-dtype hidden for matmul 2
    weight_bytes = (2 * cdt * (pack * D * pack * H + pack * H * pack * Ep)
                    + 2 * 4 * pack * (H + Ep))

    hard_cap = 2048 if vmem <= (64 << 20) else 4096      # v7x: half the VMEM
    if max_block_rows is not None:
        hard_cap = min(hard_cap, max(16, max_block_rows // pack))
    budget = min(vmem // 3, 48 << 20)
    cap = max(16, min(hard_cap, (budget - weight_bytes) // per_row))
    cap = max(16, (cap // 16) * 16)                      # (16,128) bf16-friendly

    def forward_impl(x, w1p, b1p, w2p, b2p):
        B = x.shape[0]
        assert x.shape[1] == D

        rows = pl.cdiv(B, pack)
        tile_r = min(cap, _round_up(rows, 16))
        tile_r = max(16, (tile_r // 16) * 16)
        grid_r = pl.cdiv(rows, tile_r)
        # v7x: keep >= 2 grid steps so both TensorCores get work (the extra
        # ~0.35us step is noise on single-TC v5e/v6e).
        if grid_r == 1 and tile_r >= 512:
            tile_r = max(16, _round_up(pl.cdiv(rows, 2), 16))
            grid_r = pl.cdiv(rows, tile_r)
        rows_pad = grid_r * tile_r
        b_pad = rows_pad * pack

        vmem_need = weight_bytes + tile_r * per_row + (4 << 20)
        vmem_limit = int(min(max(vmem_need, 32 << 20),
                             max(32 << 20, vmem - (8 << 20))))

        # Pure row-major layout plumbing: no dtype cast, no extra HBM pass.
        xp = x if b_pad == B else jnp.pad(x, ((0, b_pad - B), (0, 0)))
        xp = xp.reshape(rows_pad, pack * D)

        out_p = pl.pallas_call(
            mlp_kernel,
            out_shape=jax.ShapeDtypeStruct((rows_pad, pack * Ep), out_dtype),
            grid=(grid_r,),
            in_specs=[
                # lane-dense batch tile of the packed input
                pl.BlockSpec((tile_r, pack * D), lambda i: (i, 0)),
                # weights / biases resident in VMEM across all grid steps
                pl.BlockSpec((pack * D, pack * H), lambda i: (0, 0)),
                pl.BlockSpec((1, pack * H), lambda i: (0, 0)),
                pl.BlockSpec((pack * H, pack * Ep), lambda i: (0, 0)),
                pl.BlockSpec((1, pack * Ep), lambda i: (0, 0)),
            ],
            out_specs=pl.BlockSpec((tile_r, pack * Ep), lambda i: (i, 0)),
            compiler_params=pltpu.CompilerParams(
                dimension_semantics=("parallel",),   # v7x shards steps over 2 TCs
                vmem_limit_bytes=vmem_limit,
            ),
        )(xp, w1p, b1p, w2p, b2p)

        out = out_p.reshape(b_pad, Ep)[:B]
        if Ep != E:
            out = out[:, :E]
        return out

    jitted = jax.jit(forward_impl)
    return lambda x: jitted(x, w1p, b1p, w2p, b2p)


def init_params(key, input_dim, hidden_dim, embedding_dim):
    """Deterministic init mimicking torch.nn.Linear default
    (U[-1/sqrt(fan_in), +1/sqrt(fan_in)])."""
    k1, k2, k3, k4 = jax.random.split(key, 4)
    bound1 = 1.0 / jnp.sqrt(jnp.float32(input_dim))
    bound2 = 1.0 / jnp.sqrt(jnp.float32(hidden_dim))
    w1 = jax.random.uniform(k1, (input_dim, hidden_dim), jnp.float32, -bound1, bound1)
    b1 = jax.random.uniform(k2, (1, hidden_dim), jnp.float32, -bound1, bound1)
    w2 = jax.random.uniform(k3, (hidden_dim, embedding_dim), jnp.float32, -bound2, bound2)
    b2 = jax.random.uniform(k4, (1, embedding_dim), jnp.float32, -bound2, bound2)
    return w1, b1, w2, b2


if __name__ == "__main__":
    # Small shapes consistent with the module: batch=16, input_dim=16,
    # hidden=32 (fixed by the module), embedding_dim=8.
    batch, input_dim, hidden_dim, embedding_dim = 16, 16, 32, 8

    key = jax.random.PRNGKey(0)
    kx, kp = jax.random.split(key)
    x = jax.random.normal(kx, (batch, input_dim), jnp.float32)
    w1, b1, w2, b2 = init_params(kp, input_dim, hidden_dim, embedding_dim)

    fwd = make_contrastive_forward(w1, b1, w2, b2)
    out = jax.block_until_ready(fwd(x))
    assert out.shape == (batch, embedding_dim)

    # Reference mirroring the kernel's dtype pipeline (bf16 W1/W2 and the
    # in-kernel bf16 casts of x and the layer-1 activations; f32 accumulation).
    f32, bf16 = jnp.float32, jnp.bfloat16
    xb = x.astype(bf16).astype(f32)
    w1b = w1.astype(bf16).astype(f32)
    w2b = w2.astype(bf16).astype(f32)
    h = jnp.maximum(xb @ w1b + b1, 0.0).astype(bf16).astype(f32)
    ref = h @ w2b + b2
    assert jnp.allclose(out, ref, atol=1e-2, rtol=1e-2), \
        float(jnp.max(jnp.abs(out - ref)))

    # Loose sanity check against the pure-f32 module math.
    ref_f32 = jnp.maximum(x @ w1 + b1, 0.0) @ w2 + b2
    assert jnp.allclose(out, ref_f32, atol=1e-1, rtol=1e-1)

    # Exercise the embedding_dim-padding (5 does not divide 128) and the
    # batch-padding paths flagged in the review.
    e2, batch2 = 5, 7
    w1b2, b1b2, w2b2, b2b2 = init_params(jax.random.PRNGKey(1),
                                         input_dim, hidden_dim, e2)
    x2 = jax.random.normal(jax.random.PRNGKey(2), (batch2, input_dim), jnp.float32)
    fwd2 = make_contrastive_forward(w1b2, b1b2, w2b2, b2b2)
    out2 = jax.block_until_ready(fwd2(x2))
    assert out2.shape == (batch2, e2)
    ref2 = jnp.maximum(x2 @ w1b2 + b1b2, 0.0) @ w2b2 + b2b2
    assert jnp.allclose(out2, ref2, atol=1e-1, rtol=1e-1)

    print("KERNEL_OK")
</pallas_src>

<mosaic_0001>
module attributes {stable_mosaic.version = 11 : i64} {
  func.func @mlp_kernel(%arg0: i32, %arg1: memref<16x256xf32, #tpu.memory_space<vmem>>, %arg2: memref<256x512xbf16, #tpu.memory_space<vmem>>, %arg3: memref<1x512xf32, #tpu.memory_space<vmem>>, %arg4: memref<512x128xbf16, #tpu.memory_space<vmem>>, %arg5: memref<1x128xf32, #tpu.memory_space<vmem>>, %arg6: memref<16x128xf32, #tpu.memory_space<vmem>>) attributes {dimension_semantics = [#tpu.dimension_semantics<parallel>], iteration_bounds = array<i64: 1>, scalar_prefetch = 0 : i64, scratch_operands = 0 : i64, tpu.core_type = #tpu.core_type<tc>, window_params = [{transform_indices = @transform_0, window_bounds = array<i64: 16, 256>}, {pipeline_mode = #tpu.pipeline_mode<synchronous>, transform_indices = @transform_1, window_bounds = array<i64: 256, 512>}, {pipeline_mode = #tpu.pipeline_mode<synchronous>, transform_indices = @transform_2, window_bounds = array<i64: 1, 512>}, {pipeline_mode = #tpu.pipeline_mode<synchronous>, transform_indices = @transform_3, window_bounds = array<i64: 512, 128>}, {pipeline_mode = #tpu.pipeline_mode<synchronous>, transform_indices = @transform_4, window_bounds = array<i64: 1, 128>}, {transform_indices = @transform_5, window_bounds = array<i64: 16, 128>}]} {
    %c0 = arith.constant 0 : index
    %c0_0 = arith.constant 0 : index
    %0 = vector.load %arg1[%c0, %c0_0] : memref<16x256xf32, #tpu.memory_space<vmem>>, vector<16x256xf32>
    %1 = arith.truncf %0 : vector<16x256xf32> to vector<16x256xbf16>
    %c0_1 = arith.constant 0 : index
    %c0_2 = arith.constant 0 : index
    %2 = vector.load %arg2[%c0_1, %c0_2] : memref<256x512xbf16, #tpu.memory_space<vmem>>, vector<256x512xbf16>
    %cst = arith.constant dense<0.000000e+00> : vector<16x512xf32>
    %3 = tpu.matmul %1, %2, %cst {dimension_numbers = #tpu.dot_dimension_numbers<[1], [0], [0], [1], [0, 0, 1, 1], [], []>} : vector<16x256xbf16>, vector<256x512xbf16>, vector<16x512xf32> -> vector<16x512xf32>
    %c0_3 = arith.constant 0 : index
    %c0_4 = arith.constant 0 : index
    %4 = vector.load %arg3[%c0_3, %c0_4] : memref<1x512xf32, #tpu.memory_space<vmem>>, vector<1x512xf32>
    %5 = vector.broadcast %4 : vector<1x512xf32> to vector<16x512xf32>
    %6 = arith.addf %3, %5 : vector<16x512xf32>
    %cst_5 = arith.constant 0.000000e+00 : f32
    %7 = vector.broadcast %cst_5 : f32 to vector<16x512xf32>
    %8 = arith.maximumf %6, %7 : vector<16x512xf32>
    %9 = arith.truncf %8 : vector<16x512xf32> to vector<16x512xbf16>
    %c0_6 = arith.constant 0 : index
    %c0_7 = arith.constant 0 : index
    %10 = vector.load %arg4[%c0_6, %c0_7] : memref<512x128xbf16, #tpu.memory_space<vmem>>, vector<512x128xbf16>
    %cst_8 = arith.constant dense<0.000000e+00> : vector<16x128xf32>
    %11 = tpu.matmul %9, %10, %cst_8 {dimension_numbers = #tpu.dot_dimension_numbers<[1], [0], [0], [1], [0, 0, 1, 1], [], []>} : vector<16x512xbf16>, vector<512x128xbf16>, vector<16x128xf32> -> vector<16x128xf32>
    %c0_9 = arith.constant 0 : index
    %c0_10 = arith.constant 0 : index
    %12 = vector.load %arg5[%c0_9, %c0_10] : memref<1x128xf32, #tpu.memory_space<vmem>>, vector<1x128xf32>
    %13 = vector.broadcast %12 : vector<1x128xf32> to vector<16x128xf32>
    %14 = arith.addf %11, %13 : vector<16x128xf32>
    %c0_11 = arith.constant 0 : index
    %c0_12 = arith.constant 0 : index
    %15 = vector.load %arg6[%c0_11, %c0_12] : memref<16x128xf32, #tpu.memory_space<vmem>>, vector<16x128xf32>
    tpu.vector_store %arg6[%c0_11, %c0_12], %14 {strides = array<i32>} : memref<16x128xf32, #tpu.memory_space<vmem>>, vector<16x128xf32>,
    return
  }
  func.func @transform_0(%arg0: i32) -> (i32, i32) {
    %c0_i32 = arith.constant 0 : i32
    %c0_i32_0 = arith.constant 0 : i32
    return %arg0, %c0_i32 : i32, i32
  }
  func.func @transform_1(%arg0: i32) -> (i32, i32) {
    %c0_i32 = arith.constant 0 : i32
    %c0_i32_0 = arith.constant 0 : i32
    %c0_i32_1 = arith.constant 0 : i32
    return %c0_i32, %c0_i32_0 : i32, i32
  }
  func.func @transform_2(%arg0: i32) -> (i32, i32) {
    %c0_i32 = arith.constant 0 : i32
    %c0_i32_0 = arith.constant 0 : i32
    %c0_i32_1 = arith.constant 0 : i32
    return %c0_i32, %c0_i32_0 : i32, i32
  }
  func.func @transform_3(%arg0: i32) -> (i32, i32) {
    %c0_i32 = arith.constant 0 : i32
    %c0_i32_0 = arith.constant 0 : i32
    %c0_i32_1 = arith.constant 0 : i32
    return %c0_i32, %c0_i32_0 : i32, i32
  }
  func.func @transform_4(%arg0: i32) -> (i32, i32) {
    %c0_i32 = arith.constant 0 : i32
    %c0_i32_0 = arith.constant 0 : i32
    %c0_i32_1 = arith.constant 0 : i32
    return %c0_i32, %c0_i32_0 : i32, i32
  }
  func.func @transform_5(%arg0: i32) -> (i32, i32) {
    %c0_i32 = arith.constant 0 : i32
    %c0_i32_0 = arith.constant 0 : i32
    return %arg0, %c0_i32 : i32, i32
  }
}

</mosaic_0001>

<llo_original>
// kernel: forward_impl.1
$region0: #{forward_impl.1}
  #allocation0 [shape = 'u32[]', space=smem, size = 0x4, offset = 0x4, fixed_abs, tag = 'smem constant byte address 0x4 - core index']
  #allocation1 [shape = 'u32[144,128]{1,0:T(1,128)}', space=vmem, size = 0x12000, scoped, tag = 'internal scratch']
  %s0 = inlined_call_operand.vmem [shape: f32[16,256], index: 0, kind: input, shape index: {}]
  %s1 = inlined_call_operand.vmem [shape: bf16[256,512], index: 1, kind: input, shape index: {}]
  %s2 = inlined_call_operand.vmem [shape: f32[1,512], index: 2, kind: input, shape index: {}]
  %s3 = inlined_call_operand.hbm [shape: bf16[512,128], index: 3, kind: input, shape index: {}]
  %s4 = inlined_call_operand.vmem [shape: f32[1,128], index: 4, kind: input, shape index: {}]
  %s5 = inlined_call_operand.vmem [shape: f32[16,128], index: 5, kind: output, shape index: {}]
  %s6 = sld [smem:[#allocation0]]
  $region34: #{forward_impl.1} parent=0
    _
  %s8 = ssub.s32 1, %s6
  %s9 = scalar_select 0, %s8, %s6
  $region1: #{forward_impl.1} parent=0
    #allocation2 [shape = 'u8[131072]{0}', space=vmem, size = 0x20000, scoped, tag = 'input window, operand 3, single buffered']
    #allocation3 [shape = 's32[1]{0}', space=sflag, size = 0x4, scoped, tag = 'scoped memory for forward_impl.1']
    %10 = vsyncpa [#allocation3], 0
    // Predicated region
    $region2: #{forward_impl.1} parent=1 // pred_check
      _
    $region3: #{forward_impl.1} parent=1 // pred_check_branch
      %12 = sbr.rel (0) target = $region5
    $region4: #{forward_impl.1} parent=1 // pred_region
      _
    $region5: #{forward_impl.1} parent=1 // pred_fallthru
      _
    // Predicated region
    $region6: #{forward_impl.1} parent=1 // pred_check
      _
    $region7: #{forward_impl.1} parent=1 // pred_check_branch
      %14 = sbr.rel (0) target = $region9
    $region8: #{forward_impl.1} parent=1 // pred_region
      _
    $region9: #{forward_impl.1} parent=1 // pred_fallthru
      _
    // Predicated region
    $region10: #{forward_impl.1} parent=1 // pred_check
      _
    $region11: #{forward_impl.1} parent=1 // pred_check_branch
      %16 = sbr.rel (0) target = $region13
    $region12: #{forward_impl.1} parent=1 // pred_region
      _
    $region13: #{forward_impl.1} parent=1 // pred_fallthru
      _
    // Predicated region
    $region14: #{forward_impl.1} parent=1 // pred_check
      _
    $region15: #{forward_impl.1} parent=1 // pred_check_branch
      %18 = sbr.rel (0) target = $region17
    $region16: #{forward_impl.1} parent=1 // pred_region
      %s20 = ssub.s32 4096, 4096
      %21 = vsyncadd [#allocation3], %s20
      %s22 = sshll.u32 [#allocation2], 4
      %s23 = int_to_ptr.vmem [resolvable:$true] %s22
      %28 = dma.hbm_to_vmem [thread:$0]  %s3, 4096, %s23, [#allocation3], 64, 64, 4
    $region17: #{forward_impl.1} parent=1 // pred_fallthru
      _
    // Predicated region
    $region18: #{forward_impl.1} parent=1 // pred_check
      _
    $region19: #{forward_impl.1} parent=1 // pred_check_branch
      %30 = sbr.rel (0) target = $region21
    $region20: #{forward_impl.1} parent=1 // pred_region
      _
    $region21: #{forward_impl.1} parent=1 // pred_fallthru
      _
    // Predicated region
    $region22: #{forward_impl.1} parent=1 // pred_check
      _
    $region23: #{forward_impl.1} parent=1 // pred_check_branch
      %32 = sbr.rel (0) target = $region25
    $region24: #{forward_impl.1} parent=1 // pred_region
      %33 = dma.done [#allocation3], 4096
    $region25: #{forward_impl.1} parent=1 // pred_fallthru
      _
    %v35 = vld [vmem:[%s0] sm:$0xff]
    %v36 = vld [vmem:[%s0 + $0x8] sm:$0xff]
    %v37 = vld [vmem:[%s0 + $0x10] sm:$0xff]
    %v38 = vld [vmem:[%s0 + $0x18] sm:$0xff]
    %v39 = vpack.c.bf16 %v37, %v35
    %v40 = vpack.c.bf16 %v38, %v36
    %v41 = vld [vmem:[%s1] sm:$0xff]
    %v42 = vld [vmem:[%s1 + $0x8] sm:$0xff]
    %v43 = vld [vmem:[%s1 + $0x10] sm:$0xff]
    %v44 = vld [vmem:[%s1 + $0x18] sm:$0xff]
    %v45 = vld [vmem:[%s1 + $0x20] sm:$0xff]
    %v46 = vld [vmem:[%s1 + $0x28] sm:$0xff]
    %v47 = vld [vmem:[%s1 + $0x30] sm:$0xff]
    %v48 = vld [vmem:[%s1 + $0x38] sm:$0xff]
    %v49 = vld [vmem:[%s1 + $0x40] sm:$0xff]
    %v50 = vld [vmem:[%s1 + $0x48] sm:$0xff]
    %v51 = vld [vmem:[%s1 + $0x50] sm:$0xff]
    %v52 = vld [vmem:[%s1 + $0x58] sm:$0xff]
    %v53 = vld [vmem:[%s1 + $0x60] sm:$0xff]
    %v54 = vld [vmem:[%s1 + $0x68] sm:$0xff]
    %v55 = vld [vmem:[%s1 + $0x70] sm:$0xff]
    %v56 = vld [vmem:[%s1 + $0x78] sm:$0xff]
    %v57 = vld [vmem:[%s1 + $0x80] sm:$0xff]
    %v58 = vld [vmem:[%s1 + $0x88] sm:$0xff]
    %v59 = vld [vmem:[%s1 + $0x90] sm:$0xff]
    %v60 = vld [vmem:[%s1 + $0x98] sm:$0xff]
    %v61 = vld [vmem:[%s1 + $0xa0] sm:$0xff]
    %v62 = vld [vmem:[%s1 + $0xa8] sm:$0xff]
    %v63 = vld [vmem:[%s1 + $0xb0] sm:$0xff]
    %v64 = vld [vmem:[%s1 + $0xb8] sm:$0xff]
    %v65 = vld [vmem:[%s1 + $0xc0] sm:$0xff]
    %v66 = vld [vmem:[%s1 + $0xc8] sm:$0xff]
    %v67 = vld [vmem:[%s1 + $0xd0] sm:$0xff]
    %v68 = vld [vmem:[%s1 + $0xd8] sm:$0xff]
    %v69 = vld [vmem:[%s1 + $0xe0] sm:$0xff]
    %v70 = vld [vmem:[%s1 + $0xe8] sm:$0xff]
    %v71 = vld [vmem:[%s1 + $0xf0] sm:$0xff]
    %v72 = vld [vmem:[%s1 + $0xf8] sm:$0xff]
    %v73 = vld [vmem:[%s1 + $0x100] sm:$0xff]
    %v74 = vld [vmem:[%s1 + $0x108] sm:$0xff]
    %v75 = vld [vmem:[%s1 + $0x110] sm:$0xff]
    %v76 = vld [vmem:[%s1 + $0x118] sm:$0xff]
    %v77 = vld [vmem:[%s1 + $0x120] sm:$0xff]
    %v78 = vld [vmem:[%s1 + $0x128] sm:$0xff]
    %v79 = vld [vmem:[%s1 + $0x130] sm:$0xff]
    %v80 = vld [vmem:[%s1 + $0x138] sm:$0xff]
    %v81 = vld [vmem:[%s1 + $0x140] sm:$0xff]
    %v82 = vld [vmem:[%s1 + $0x148] sm:$0xff]
    %v83 = vld [vmem:[%s1 + $0x150] sm:$0xff]
    %v84 = vld [vmem:[%s1 + $0x158] sm:$0xff]
    %v85 = vld [vmem:[%s1 + $0x160] sm:$0xff]
    %v86 = vld [vmem:[%s1 + $0x168] sm:$0xff]
    %v87 = vld [vmem:[%s1 + $0x170] sm:$0xff]
    %v88 = vld [vmem:[%s1 + $0x178] sm:$0xff]
    %v89 = vld [vmem:[%s1 + $0x180] sm:$0xff]
    %v90 = vld [vmem:[%s1 + $0x188] sm:$0xff]
    %v91 = vld [vmem:[%s1 + $0x190] sm:$0xff]
    %v92 = vld [vmem:[%s1 + $0x198] sm:$0xff]
    %v93 = vld [vmem:[%s1 + $0x1a0] sm:$0xff]
    %v94 = vld [vmem:[%s1 + $0x1a8] sm:$0xff]
    %v95 = vld [vmem:[%s1 + $0x1b0] sm:$0xff]
    %v96 = vld [vmem:[%s1 + $0x1b8] sm:$0xff]
    %v97 = vld [vmem:[%s1 + $0x1c0] sm:$0xff]
    %v98 = vld [vmem:[%s1 + $0x1c8] sm:$0xff]
    %v99 = vld [vmem:[%s1 + $0x1d0] sm:$0xff]
    %v100 = vld [vmem:[%s1 + $0x1d8] sm:$0xff]
    %v101 = vld [vmem:[%s1 + $0x1e0] sm:$0xff]
    %v102 = vld [vmem:[%s1 + $0x1e8] sm:$0xff]
    %v103 = vld [vmem:[%s1 + $0x1f0] sm:$0xff]
    %v104 = vld [vmem:[%s1 + $0x1f8] sm:$0xff]
    %v105 = vld [vmem:[%s2] sm:$0xf]
    %v107 = vlaneseq
    %v108 = vshrl.u32 %v107, 7
    %v109 = vsub.s32 0, %v108
    %v110 = vrot.slane %v105, %v109
    %v111 = vlaneseq
    %v112 = vshrl.u32 %v111, 7
    %v113 = vsub.s32 1, %v112
    %v114 = vrot.slane %v105, %v113
    %v115 = vlaneseq
    %v116 = vshrl.u32 %v115, 7
    %v117 = vsub.s32 2, %v116
    %v118 = vrot.slane %v105, %v117
    %v119 = vlaneseq
    %v120 = vshrl.u32 %v119, 7
    %v121 = vsub.s32 3, %v120
    %v122 = vrot.slane %v105, %v121
    %v191 = vunpack.c.l.b16 %v41
    %v192 = vunpack.c.h.b16 %v41
    %v193 = vunpack.c.l.b16 %v42
    %v194 = vunpack.c.h.b16 %v42
    %v195 = vunpack.c.l.b16 %v43
    %v196 = vunpack.c.h.b16 %v43
    %v197 = vunpack.c.l.b16 %v44
    %v198 = vunpack.c.h.b16 %v44
    %v199 = vunpack.c.l.b16 %v45
    %v200 = vunpack.c.h.b16 %v45
    %v201 = vunpack.c.l.b16 %v46
    %v202 = vunpack.c.h.b16 %v46
    %v203 = vunpack.c.l.b16 %v47
    %v204 = vunpack.c.h.b16 %v47
    %v205 = vunpack.c.l.b16 %v48
    %v206 = vunpack.c.h.b16 %v48
    %v207 = vunpack.c.l.b16 %v49
    %v208 = vunpack.c.h.b16 %v49
    %v209 = vunpack.c.l.b16 %v50
    %v210 = vunpack.c.h.b16 %v50
    %v211 = vunpack.c.l.b16 %v51
    %v212 = vunpack.c.h.b16 %v51
    %v213 = vunpack.c.l.b16 %v52
    %v214 = vunpack.c.h.b16 %v52
    %v215 = vunpack.c.l.b16 %v53
    %v216 = vunpack.c.h.b16 %v53
    %v217 = vunpack.c.l.b16 %v54
    %v218 = vunpack.c.h.b16 %v54
    %v219 = vunpack.c.l.b16 %v55
    %v220 = vunpack.c.h.b16 %v55
    %v221 = vunpack.c.l.b16 %v56
    %v222 = vunpack.c.h.b16 %v56
    %v223 = vunpack.c.l.b16 %v57
    %v224 = vunpack.c.h.b16 %v57
    %v225 = vunpack.c.l.b16 %v58
    %v226 = vunpack.c.h.b16 %v58
    %v227 = vunpack.c.l.b16 %v59
    %v228 = vunpack.c.h.b16 %v59
    %v229 = vunpack.c.l.b16 %v60
    %v230 = vunpack.c.h.b16 %v60
    %v231 = vunpack.c.l.b16 %v61
    %v232 = vunpack.c.h.b16 %v61
    %v233 = vunpack.c.l.b16 %v62
    %v234 = vunpack.c.h.b16 %v62
    %v235 = vunpack.c.l.b16 %v63
    %v236 = vunpack.c.h.b16 %v63
    %v237 = vunpack.c.l.b16 %v64
    %v238 = vunpack.c.h.b16 %v64
    %v239 = vunpack.c.l.b16 %v65
    %v240 = vunpack.c.h.b16 %v65
    %v241 = vunpack.c.l.b16 %v66
    %v242 = vunpack.c.h.b16 %v66
    %v243 = vunpack.c.l.b16 %v67
    %v244 = vunpack.c.h.b16 %v67
    %v245 = vunpack.c.l.b16 %v68
    %v246 = vunpack.c.h.b16 %v68
    %v247 = vunpack.c.l.b16 %v69
    %v248 = vunpack.c.h.b16 %v69
    %v249 = vunpack.c.l.b16 %v70
    %v250 = vunpack.c.h.b16 %v70
    %v251 = vunpack.c.l.b16 %v71
    %v252 = vunpack.c.h.b16 %v71
    %v253 = vunpack.c.l.b16 %v72
    %v254 = vunpack.c.h.b16 %v72
    %v255 = vunpack.c.l.b16 %v73
    %v256 = vunpack.c.h.b16 %v73
    %v257 = vunpack.c.l.b16 %v74
    %v258 = vunpack.c.h.b16 %v74
    %v259 = vunpack.c.l.b16 %v75
    %v260 = vunpack.c.h.b16 %v75
    %v261 = vunpack.c.l.b16 %v76
    %v262 = vunpack.c.h.b16 %v76
    %v263 = vunpack.c.l.b16 %v77
    %v264 = vunpack.c.h.b16 %v77
    %v265 = vunpack.c.l.b16 %v78
    %v266 = vunpack.c.h.b16 %v78
    %v267 = vunpack.c.l.b16 %v79
    %v268 = vunpack.c.h.b16 %v79
    %v269 = vunpack.c.l.b16 %v80
    %v270 = vunpack.c.h.b16 %v80
    %v271 = vunpack.c.l.b16 %v81
    %v272 = vunpack.c.h.b16 %v81
    %v273 = vunpack.c.l.b16 %v82
    %v274 = vunpack.c.h.b16 %v82
    %v275 = vunpack.c.l.b16 %v83
    %v276 = vunpack.c.h.b16 %v83
    %v277 = vunpack.c.l.b16 %v84
    %v278 = vunpack.c.h.b16 %v84
    %v279 = vunpack.c.l.b16 %v85
    %v280 = vunpack.c.h.b16 %v85
    %v281 = vunpack.c.l.b16 %v86
    %v282 = vunpack.c.h.b16 %v86
    %v283 = vunpack.c.l.b16 %v87
    %v284 = vunpack.c.h.b16 %v87
    %v285 = vunpack.c.l.b16 %v88
    %v286 = vunpack.c.h.b16 %v88
    %v287 = vunpack.c.l.b16 %v89
    %v288 = vunpack.c.h.b16 %v89
    %v289 = vunpack.c.l.b16 %v90
    %v290 = vunpack.c.h.b16 %v90
    %v291 = vunpack.c.l.b16 %v91
    %v292 = vunpack.c.h.b16 %v91
    %v293 = vunpack.c.l.b16 %v92
    %v294 = vunpack.c.h.b16 %v92
    %v295 = vunpack.c.l.b16 %v93
    %v296 = vunpack.c.h.b16 %v93
    %v297 = vunpack.c.l.b16 %v94
    %v298 = vunpack.c.h.b16 %v94
    %v299 = vunpack.c.l.b16 %v95
    %v300 = vunpack.c.h.b16 %v95
    %v301 = vunpack.c.l.b16 %v96
    %v302 = vunpack.c.h.b16 %v96
    %v303 = vunpack.c.l.b16 %v97
    %v304 = vunpack.c.h.b16 %v97
    %v305 = vunpack.c.l.b16 %v98
    %v306 = vunpack.c.h.b16 %v98
    %v307 = vunpack.c.l.b16 %v99
    %v308 = vunpack.c.h.b16 %v99
    %v309 = vunpack.c.l.b16 %v100
    %v310 = vunpack.c.h.b16 %v100
    %v311 = vunpack.c.l.b16 %v101
    %v312 = vunpack.c.h.b16 %v101
    %v313 = vunpack.c.l.b16 %v102
    %v314 = vunpack.c.h.b16 %v102
    %v315 = vunpack.c.l.b16 %v103
    %v316 = vunpack.c.h.b16 %v103
    %v317 = vunpack.c.l.b16 %v104
    %v318 = vunpack.c.h.b16 %v104
    %v319 = vpack.c.b16 %v195, %v191
    %v320 = vpack.c.b16 %v196, %v192
    %v321 = vpack.c.b16 %v197, %v193
    %v322 = vpack.c.b16 %v198, %v194
    %v323 = vpack.c.b16 %v203, %v199
    %v324 = vpack.c.b16 %v204, %v200
    %v325 = vpack.c.b16 %v205, %v201
    %v326 = vpack.c.b16 %v206, %v202
    %v327 = vpack.c.b16 %v211, %v207
    %v328 = vpack.c.b16 %v212, %v208
    %v329 = vpack.c.b16 %v213, %v209
    %v330 = vpack.c.b16 %v214, %v210
    %v331 = vpack.c.b16 %v219, %v215
    %v332 = vpack.c.b16 %v220, %v216
    %v333 = vpack.c.b16 %v221, %v217
    %v334 = vpack.c.b16 %v222, %v218
    %v335 = vpack.c.b16 %v227, %v223
    %v336 = vpack.c.b16 %v228, %v224
    %v337 = vpack.c.b16 %v229, %v225
    %v338 = vpack.c.b16 %v230, %v226
    %v339 = vpack.c.b16 %v235, %v231
    %v340 = vpack.c.b16 %v236, %v232
    %v341 = vpack.c.b16 %v237, %v233
    %v342 = vpack.c.b16 %v238, %v234
    %v343 = vpack.c.b16 %v243, %v239
    %v344 = vpack.c.b16 %v244, %v240
    %v345 = vpack.c.b16 %v245, %v241
    %v346 = vpack.c.b16 %v246, %v242
    %v347 = vpack.c.b16 %v251, %v247
    %v348 = vpack.c.b16 %v252, %v248
    %v349 = vpack.c.b16 %v253, %v249
    %v350 = vpack.c.b16 %v254, %v250
    %v351 = vpack.c.b16 %v259, %v255
    %v352 = vpack.c.b16 %v260, %v256
    %v353 = vpack.c.b16 %v261, %v257
    %v354 = vpack.c.b16 %v262, %v258
    %v355 = vpack.c.b16 %v267, %v263
    %v356 = vpack.c.b16 %v268, %v264
    %v357 = vpack.c.b16 %v269, %v265
    %v358 = vpack.c.b16 %v270, %v266
    %v359 = vpack.c.b16 %v275, %v271
    %v360 = vpack.c.b16 %v276, %v272
    %v361 = vpack.c.b16 %v277, %v273
    %v362 = vpack.c.b16 %v278, %v274
    %v363 = vpack.c.b16 %v283, %v279
    %v364 = vpack.c.b16 %v284, %v280
    %v365 = vpack.c.b16 %v285, %v281
    %v366 = vpack.c.b16 %v286, %v282
    %v367 = vpack.c.b16 %v291, %v287
    %v368 = vpack.c.b16 %v292, %v288
    %v369 = vpack.c.b16 %v293, %v289
    %v370 = vpack.c.b16 %v294, %v290
    %v371 = vpack.c.b16 %v299, %v295
    %v372 = vpack.c.b16 %v300, %v296
    %v373 = vpack.c.b16 %v301, %v297
    %v374 = vpack.c.b16 %v302, %v298
    %v375 = vpack.c.b16 %v307, %v303
    %v376 = vpack.c.b16 %v308, %v304
    %v377 = vpack.c.b16 %v309, %v305
    %v378 = vpack.c.b16 %v310, %v306
    %v379 = vpack.c.b16 %v315, %v311
    %v380 = vpack.c.b16 %v316, %v312
    %v381 = vpack.c.b16 %v317, %v313
    %v382 = vpack.c.b16 %v318, %v314
    %447 = vmatprep.subr.bf16.mxu0 %v320
    %448 = vmatpush1.bf16.msra.mxu0 %v319
    %449 = vmatprep.subr.bf16.mxu0 %v324
    %450 = vmatpush1.bf16.msra.mxu0 %v323
    %451 = vmatprep.subr.bf16.mxu0 %v328
    %452 = vmatpush1.bf16.msra.mxu0 %v327
    %453 = vmatprep.subr.bf16.mxu0 %v332
    %454 = vmatpush1.bf16.msra.mxu0 %v331
    %455 = vmatprep.subr.bf16.mxu0 %v336
    %456 = vmatpush1.bf16.msra.mxu0 %v335
    %457 = vmatprep.subr.bf16.mxu0 %v340
    %458 = vmatpush1.bf16.msra.mxu0 %v339
    %459 = vmatprep.subr.bf16.mxu0 %v344
    %460 = vmatpush1.bf16.msra.mxu0 %v343
    %461 = vmatprep.subr.bf16.mxu0 %v348
    %462 = vmatpush1.bf16.msra.mxu0 %v347
    %463 = vmatprep.subr.bf16.mxu0 %v352
    %464 = vmatpush1.bf16.msra.mxu0 %v351
    %465 = vmatprep.subr.bf16.mxu0 %v356
    %466 = vmatpush1.bf16.msra.mxu0 %v355
    %467 = vmatprep.subr.bf16.mxu0 %v360
    %468 = vmatpush1.bf16.msra.mxu0 %v359
    %469 = vmatprep.subr.bf16.mxu0 %v364
    %470 = vmatpush1.bf16.msra.mxu0 %v363
    %471 = vmatprep.subr.bf16.mxu0 %v368
    %472 = vmatpush1.bf16.msra.mxu0 %v367
    %473 = vmatprep.subr.bf16.mxu0 %v372
    %474 = vmatpush1.bf16.msra.mxu0 %v371
    %475 = vmatprep.subr.bf16.mxu0 %v376
    %476 = vmatpush1.bf16.msra.mxu0 %v375
    %477 = vmatprep.subr.bf16.mxu0 %v380
    %478 = vmatpush1.bf16.msra.mxu0 %v379
    %479 = vmatprep.mubr.bf16.mxu0 %v40
    %480 = vmatmul.mubr.bf16.gmra.mrb[0].mxu0 %v39
    %v481 = vpop.f32.mrb[0].mxu0
    %v482 = vadd.f32 %v110, %v481
    %v483 = vpop.f32.mrb[0].mxu0
    %v484 = vadd.f32 %v114, %v483
    %v485 = vpop.f32.mrb[0].mxu0
    %v486 = vadd.f32 %v110, %v485
    %v487 = vpop.f32.mrb[0].mxu0
    %v488 = vadd.f32 %v114, %v487
    %489 = vdwg.mxu0
    %490 = vmatprep.subr.bf16.mxu0 %v322
    %491 = vmatpush1.bf16.msra.mxu0 %v321
    %492 = vmatprep.subr.bf16.mxu0 %v326
    %493 = vmatpush1.bf16.msra.mxu0 %v325
    %494 = vmatprep.subr.bf16.mxu0 %v330
    %495 = vmatpush1.bf16.msra.mxu0 %v329
    %496 = vmatprep.subr.bf16.mxu0 %v334
    %497 = vmatpush1.bf16.msra.mxu0 %v333
    %498 = vmatprep.subr.bf16.mxu0 %v338
    %499 = vmatpush1.bf16.msra.mxu0 %v337
    %500 = vmatprep.subr.bf16.mxu0 %v342
    %501 = vmatpush1.bf16.msra.mxu0 %v341
    %502 = vmatprep.subr.bf16.mxu0 %v346
    %503 = vmatpush1.bf16.msra.mxu0 %v345
    %504 = vmatprep.subr.bf16.mxu0 %v350
    %505 = vmatpush1.bf16.msra.mxu0 %v349
    %506 = vmatprep.subr.bf16.mxu0 %v354
    %507 = vmatpush1.bf16.msra.mxu0 %v353
    %508 = vmatprep.subr.bf16.mxu0 %v358
    %509 = vmatpush1.bf16.msra.mxu0 %v357
    %510 = vmatprep.subr.bf16.mxu0 %v362
    %511 = vmatpush1.bf16.msra.mxu0 %v361
    %512 = vmatprep.subr.bf16.mxu0 %v366
    %513 = vmatpush1.bf16.msra.mxu0 %v365
    %514 = vmatprep.subr.bf16.mxu0 %v370
    %515 = vmatpush1.bf16.msra.mxu0 %v369
    %516 = vmatprep.subr.bf16.mxu0 %v374
    %517 = vmatpush1.bf16.msra.mxu0 %v373
    %518 = vmatprep.subr.bf16.mxu0 %v378
    %519 = vmatpush1.bf16.msra.mxu0 %v377
    %520 = vmatprep.subr.bf16.mxu0 %v382
    %521 = vmatpush1.bf16.msra.mxu0 %v381
    %522 = vmatprep.mubr.bf16.mxu0 %v40
    %523 = vmatmul.mubr.bf16.gmra.mrb[0].mxu0 %v39
    %v524 = vpop.f32.mrb[0].mxu0
    %v525 = vadd.f32 %v118, %v524
    %v526 = vpop.f32.mrb[0].mxu0
    %v527 = vadd.f32 %v122, %v526
    %v528 = vpop.f32.mrb[0].mxu0
    %v529 = vadd.f32 %v118, %v528
    %v530 = vpop.f32.mrb[0].mxu0
    %v531 = vadd.f32 %v122, %v530
    %532 = vdwg.mxu0
    %v533 = vmax.f32 %v482, 0.0
    %v534 = vmax.f32 %v484, 0.0
    %v535 = vmax.f32 %v525, 0.0
    %v536 = vmax.f32 %v527, 0.0
    %v537 = vmax.f32 %v486, 0.0
    %v538 = vmax.f32 %v488, 0.0
    %v539 = vmax.f32 %v529, 0.0
    %v540 = vmax.f32 %v531, 0.0
    %v541 = vpack.c.bf16 %v537, %v533
    %v542 = vpack.c.bf16 %v538, %v534
    %v543 = vpack.c.bf16 %v539, %v535
    %v544 = vpack.c.bf16 %v540, %v536
    %v545 = vld [vmem:[#allocation2] sm:$0xf]
    %v546 = vld [vmem:[#allocation2 + $0x4] sm:$0xf]
    %v547 = vld [vmem:[#allocation2 + $0x8] sm:$0xf]
    %v548 = vld [vmem:[#allocation2 + $0xc] sm:$0xf]
    %v549 = vld [vmem:[#allocation2 + $0x10] sm:$0xf]
    %v550 = vld [vmem:[#allocation2 + $0x14] sm:$0xf]
    %v551 = vld [vmem:[#allocation2 + $0x18] sm:$0xf]
    %v552 = vld [vmem:[#allocation2 + $0x1c] sm:$0xf]
    %v553 = vld [vmem:[#allocation2 + $0x20] sm:$0xf]
    %v554 = vld [vmem:[#allocation2 + $0x24] sm:$0xf]
    %v555 = vld [vmem:[#allocation2 + $0x28] sm:$0xf]
    %v556 = vld [vmem:[#allocation2 + $0x2c] sm:$0xf]
    %v557 = vld [vmem:[#allocation2 + $0x30] sm:$0xf]
    %v558 = vld [vmem:[#allocation2 + $0x34] sm:$0xf]
    %v559 = vld [vmem:[#allocation2 + $0x38] sm:$0xf]
    %v560 = vld [vmem:[#allocation2 + $0x3c] sm:$0xf]
    %v561 = vld [vmem:[#allocation2 + $0x40] sm:$0xf]
    %v562 = vld [vmem:[#allocation2 + $0x44] sm:$0xf]
    %v563 = vld [vmem:[#allocation2 + $0x48] sm:$0xf]
    %v564 = vld [vmem:[#allocation2 + $0x4c] sm:$0xf]
    %v565 = vld [vmem:[#allocation2 + $0x50] sm:$0xf]
    %v566 = vld [vmem:[#allocation2 + $0x54] sm:$0xf]
    %v567 = vld [vmem:[#allocation2 + $0x58] sm:$0xf]
    %v568 = vld [vmem:[#allocation2 + $0x5c] sm:$0xf]
    %v569 = vld [vmem:[#allocation2 + $0x60] sm:$0xf]
    %v570 = vld [vmem:[#allocation2 + $0x64] sm:$0xf]
    %v571 = vld [vmem:[#allocation2 + $0x68] sm:$0xf]
    %v572 = vld [vmem:[#allocation2 + $0x6c] sm:$0xf]
    %v573 = vld [vmem:[#allocation2 + $0x70] sm:$0xf]
    %v574 = vld [vmem:[#allocation2 + $0x74] sm:$0xf]
    %v575 = vld [vmem:[#allocation2 + $0x78] sm:$0xf]
    %v576 = vld [vmem:[#allocation2 + $0x7c] sm:$0xf]
    %v577 = vld [vmem:[#allocation2 + $0x80] sm:$0xf]
    %v578 = vld [vmem:[#allocation2 + $0x84] sm:$0xf]
    %v579 = vld [vmem:[#allocation2 + $0x88] sm:$0xf]
    %v580 = vld [vmem:[#allocation2 + $0x8c] sm:$0xf]
    %v581 = vld [vmem:[#allocation2 + $0x90] sm:$0xf]
    %v582 = vld [vmem:[#allocation2 + $0x94] sm:$0xf]
    %v583 = vld [vmem:[#allocation2 + $0x98] sm:$0xf]
    %v584 = vld [vmem:[#allocation2 + $0x9c] sm:$0xf]
    %v585 = vld [vmem:[#allocation2 + $0xa0] sm:$0xf]
    %v586 = vld [vmem:[#allocation2 + $0xa4] sm:$0xf]
    %v587 = vld [vmem:[#allocation2 + $0xa8] sm:$0xf]
    %v588 = vld [vmem:[#allocation2 + $0xac] sm:$0xf]
    %v589 = vld [vmem:[#allocation2 + $0xb0] sm:$0xf]
    %v590 = vld [vmem:[#allocation2 + $0xb4] sm:$0xf]
    %v591 = vld [vmem:[#allocation2 + $0xb8] sm:$0xf]
    %v592 = vld [vmem:[#allocation2 + $0xbc] sm:$0xf]
    %v593 = vld [vmem:[#allocation2 + $0xc0] sm:$0xf]
    %v594 = vld [vmem:[#allocation2 + $0xc4] sm:$0xf]
    %v595 = vld [vmem:[#allocation2 + $0xc8] sm:$0xf]
    %v596 = vld [vmem:[#allocation2 + $0xcc] sm:$0xf]
    %v597 = vld [vmem:[#allocation2 + $0xd0] sm:$0xf]
    %v598 = vld [vmem:[#allocation2 + $0xd4] sm:$0xf]
    %v599 = vld [vmem:[#allocation2 + $0xd8] sm:$0xf]
    %v600 = vld [vmem:[#allocation2 + $0xdc] sm:$0xf]
    %v601 = vld [vmem:[#allocation2 + $0xe0] sm:$0xf]
    %v602 = vld [vmem:[#allocation2 + $0xe4] sm:$0xf]
    %v603 = vld [vmem:[#allocation2 + $0xe8] sm:$0xf]
    %v604 = vld [vmem:[#allocation2 + $0xec] sm:$0xf]
    %v605 = vld [vmem:[#allocation2 + $0xf0] sm:$0xf]
    %v606 = vld [vmem:[#allocation2 + $0xf4] sm:$0xf]
    %v607 = vld [vmem:[#allocation2 + $0xf8] sm:$0xf]
    %v608 = vld [vmem:[#allocation2 + $0xfc] sm:$0xf]
    %v609 = vld [vmem:[%s4] sm:$0x1]
    %v611 = vlaneseq
    %v612 = vshrl.u32 %v611, 7
    %v613 = vsub.s32 0, %v612
    %v614 = vrot.slane %v609, %v613
    %v680 = vunpack.c.l.b16 %v545
    %v681 = vunpack.c.l.b16 %v546
    %v682 = vunpack.c.l.b16 %v547
    %v683 = vunpack.c.l.b16 %v548
    %v684 = vunpack.c.l.b16 %v549
    %v685 = vunpack.c.l.b16 %v550
    %v686 = vunpack.c.l.b16 %v551
    %v687 = vunpack.c.l.b16 %v552
    %v688 = vunpack.c.l.b16 %v553
    %v689 = vunpack.c.l.b16 %v554
    %v690 = vunpack.c.l.b16 %v555
    %v691 = vunpack.c.l.b16 %v556
    %v692 = vunpack.c.l.b16 %v557
    %v693 = vunpack.c.l.b16 %v558
    %v694 = vunpack.c.l.b16 %v559
    %v695 = vunpack.c.l.b16 %v560
    %v696 = vunpack.c.l.b16 %v561
    %v697 = vunpack.c.l.b16 %v562
    %v698 = vunpack.c.l.b16 %v563
    %v699 = vunpack.c.l.b16 %v564
    %v700 = vunpack.c.l.b16 %v565
    %v701 = vunpack.c.l.b16 %v566
    %v702 = vunpack.c.l.b16 %v567
    %v703 = vunpack.c.l.b16 %v568
    %v704 = vunpack.c.l.b16 %v569
    %v705 = vunpack.c.l.b16 %v570
    %v706 = vunpack.c.l.b16 %v571
    %v707 = vunpack.c.l.b16 %v572
    %v708 = vunpack.c.l.b16 %v573
    %v709 = vunpack.c.l.b16 %v574
    %v710 = vunpack.c.l.b16 %v575
    %v711 = vunpack.c.l.b16 %v576
    %v712 = vunpack.c.l.b16 %v577
    %v713 = vunpack.c.l.b16 %v578
    %v714 = vunpack.c.l.b16 %v579
    %v715 = vunpack.c.l.b16 %v580
    %v716 = vunpack.c.l.b16 %v581
    %v717 = vunpack.c.l.b16 %v582
    %v718 = vunpack.c.l.b16 %v583
    %v719 = vunpack.c.l.b16 %v584
    %v720 = vunpack.c.l.b16 %v585
    %v721 = vunpack.c.l.b16 %v586
    %v722 = vunpack.c.l.b16 %v587
    %v723 = vunpack.c.l.b16 %v588
    %v724 = vunpack.c.l.b16 %v589
    %v725 = vunpack.c.l.b16 %v590
    %v726 = vunpack.c.l.b16 %v591
    %v727 = vunpack.c.l.b16 %v592
    %v728 = vunpack.c.l.b16 %v593
    %v729 = vunpack.c.l.b16 %v594
    %v730 = vunpack.c.l.b16 %v595
    %v731 = vunpack.c.l.b16 %v596
    %v732 = vunpack.c.l.b16 %v597
    %v733 = vunpack.c.l.b16 %v598
    %v734 = vunpack.c.l.b16 %v599
    %v735 = vunpack.c.l.b16 %v600
    %v736 = vunpack.c.l.b16 %v601
    %v737 = vunpack.c.l.b16 %v602
    %v738 = vunpack.c.l.b16 %v603
    %v739 = vunpack.c.l.b16 %v604
    %v740 = vunpack.c.l.b16 %v605
    %v741 = vunpack.c.l.b16 %v606
    %v742 = vunpack.c.l.b16 %v607
    %v743 = vunpack.c.l.b16 %v608
    %v744 = vpack.c.b16 %v681, %v680
    %v745 = vpack.c.b16 %v683, %v682
    %v746 = vpack.c.b16 %v685, %v684
    %v747 = vpack.c.b16 %v687, %v686
    %v748 = vpack.c.b16 %v689, %v688
    %v749 = vpack.c.b16 %v691, %v690
    %v750 = vpack.c.b16 %v693, %v692
    %v751 = vpack.c.b16 %v695, %v694
    %v752 = vpack.c.b16 %v697, %v696
    %v753 = vpack.c.b16 %v699, %v698
    %v754 = vpack.c.b16 %v701, %v700
    %v755 = vpack.c.b16 %v703, %v702
    %v756 = vpack.c.b16 %v705, %v704
    %v757 = vpack.c.b16 %v707, %v706
    %v758 = vpack.c.b16 %v709, %v708
    %v759 = vpack.c.b16 %v711, %v710
    %v760 = vpack.c.b16 %v713, %v712
    %v761 = vpack.c.b16 %v715, %v714
    %v762 = vpack.c.b16 %v717, %v716
    %v763 = vpack.c.b16 %v719, %v718
    %v764 = vpack.c.b16 %v721, %v720
    %v765 = vpack.c.b16 %v723, %v722
    %v766 = vpack.c.b16 %v725, %v724
    %v767 = vpack.c.b16 %v727, %v726
    %v768 = vpack.c.b16 %v729, %v728
    %v769 = vpack.c.b16 %v731, %v730
    %v770 = vpack.c.b16 %v733, %v732
    %v771 = vpack.c.b16 %v735, %v734
    %v772 = vpack.c.b16 %v737, %v736
    %v773 = vpack.c.b16 %v739, %v738
    %v774 = vpack.c.b16 %v741, %v740
    %v775 = vpack.c.b16 %v743, %v742
    %808 = vmatprep.subr.bf16.mxu0 0
    %809 = vmatpush1.bf16.msra.mxu0 %v744
    %810 = vmatprep.subr.bf16.mxu0 0
    %811 = vmatpush1.bf16.msra.mxu0 %v745
    %812 = vmatprep.subr.bf16.mxu0 0
    %813 = vmatpush1.bf16.msra.mxu0 %v746
    %814 = vmatprep.subr.bf16.mxu0 0
    %815 = vmatpush1.bf16.msra.mxu0 %v747
    %816 = vmatprep.subr.bf16.mxu0 0
    %817 = vmatpush1.bf16.msra.mxu0 %v748
    %818 = vmatprep.subr.bf16.mxu0 0
    %819 = vmatpush1.bf16.msra.mxu0 %v749
    %820 = vmatprep.subr.bf16.mxu0 0
    %821 = vmatpush1.bf16.msra.mxu0 %v750
    %822 = vmatprep.subr.bf16.mxu0 0
    %823 = vmatpush1.bf16.msra.mxu0 %v751
    %824 = vmatprep.subr.bf16.mxu0 0
    %825 = vmatpush1.bf16.msra.mxu0 %v752
    %826 = vmatprep.subr.bf16.mxu0 0
    %827 = vmatpush1.bf16.msra.mxu0 %v753
    %828 = vmatprep.subr.bf16.mxu0 0
    %829 = vmatpush1.bf16.msra.mxu0 %v754
    %830 = vmatprep.subr.bf16.mxu0 0
    %831 = vmatpush1.bf16.msra.mxu0 %v755
    %832 = vmatprep.subr.bf16.mxu0 0
    %833 = vmatpush1.bf16.msra.mxu0 %v756
    %834 = vmatprep.subr.bf16.mxu0 0
    %835 = vmatpush1.bf16.msra.mxu0 %v757
    %836 = vmatprep.subr.bf16.mxu0 0
    %837 = vmatpush1.bf16.msra.mxu0 %v758
    %838 = vmatprep.subr.bf16.mxu0 0
    %839 = vmatpush1.bf16.msra.mxu0 %v759
    %840 = vmatprep.mubr.bf16.mxu0 %v542
    %841 = vmatmul.mubr.bf16.gmra.mrb[0].mxu0 %v541
    %v842 = vpop.f32.mrb[0].mxu0
    %v843 = vadd.f32 %v614, %v842
    %v844 = vpop.f32.mrb[0].mxu0
    %v845 = vpop.f32.mrb[0].mxu0
    %v846 = vadd.f32 %v614, %v845
    %v847 = vpop.f32.mrb[0].mxu0
    %848 = vdwg.mxu0
    %849 = vmatprep.subr.bf16.mxu0 0
    %850 = vmatpush1.bf16.msra.mxu0 %v760
    %851 = vmatprep.subr.bf16.mxu0 0
    %852 = vmatpush1.bf16.msra.mxu0 %v761
    %853 = vmatprep.subr.bf16.mxu0 0
    %854 = vmatpush1.bf16.msra.mxu0 %v762
    %855 = vmatprep.subr.bf16.mxu0 0
    %856 = vmatpush1.bf16.msra.mxu0 %v763
    %857 = vmatprep.subr.bf16.mxu0 0
    %858 = vmatpush1.bf16.msra.mxu0 %v764
    %859 = vmatprep.subr.bf16.mxu0 0
    %860 = vmatpush1.bf16.msra.mxu0 %v765
    %861 = vmatprep.subr.bf16.mxu0 0
    %862 = vmatpush1.bf16.msra.mxu0 %v766
    %863 = vmatprep.subr.bf16.mxu0 0
    %864 = vmatpush1.bf16.msra.mxu0 %v767
    %865 = vmatprep.subr.bf16.mxu0 0
    %866 = vmatpush1.bf16.msra.mxu0 %v768
    %867 = vmatprep.subr.bf16.mxu0 0
    %868 = vmatpush1.bf16.msra.mxu0 %v769
    %869 = vmatprep.subr.bf16.mxu0 0
    %870 = vmatpush1.bf16.msra.mxu0 %v770
    %871 = vmatprep.subr.bf16.mxu0 0
    %872 = vmatpush1.bf16.msra.mxu0 %v771
    %873 = vmatprep.subr.bf16.mxu0 0
    %874 = vmatpush1.bf16.msra.mxu0 %v772
    %875 = vmatprep.subr.bf16.mxu0 0
    %876 = vmatpush1.bf16.msra.mxu0 %v773
    %877 = vmatprep.subr.bf16.mxu0 0
    %878 = vmatpush1.bf16.msra.mxu0 %v774
    %879 = vmatprep.subr.bf16.mxu0 0
    %880 = vmatpush1.bf16.msra.mxu0 %v775
    %881 = vmatprep.mubr.bf16.mxu0 %v544
    %882 = vmatmul.mubr.bf16.gmra.mrb[0].mxu0 %v543
    %v883 = vpop.f32.mrb[0].mxu0
    %v884 = vadd.f32 %v843, %v883
    %v885 = vpop.f32.mrb[0].mxu0
    %v886 = vpop.f32.mrb[0].mxu0
    %v887 = vadd.f32 %v846, %v886
    %v888 = vpop.f32.mrb[0].mxu0
    %889 = vdwg.mxu0
    %890 = vst [vmem:[%s5] sm:$0xff] %v884
    %891 = vst [vmem:[%s5 + $0x8] sm:$0xff] %v887
    // Predicated region
    $region26: #{forward_impl.1} parent=1 // pred_check
      _
    $region27: #{forward_impl.1} parent=1 // pred_check_branch
      %893 = sbr.rel (0) target = $region29
    $region28: #{forward_impl.1} parent=1 // pred_region
      _
    $region29: #{forward_impl.1} parent=1 // pred_fallthru
      _
    // Predicated region
    $region30: #{forward_impl.1} parent=1 // pred_check
      _
    $region31: #{forward_impl.1} parent=1 // pred_check_branch
      %895 = sbr.rel (0) target = $region33
    $region32: #{forward_impl.1} parent=1 // pred_region
      _
    $region33: #{forward_impl.1} parent=1 // pred_fallthru
      _
    %896 = vsyncpa [#allocation3], 1

</llo_original>
